<compile_context>
chip_gen: v7x
topology: tpu7x:2x2x1
jax: 0.10.0
libtpu: 0.0.40
codegen_flags: <defaults>
</compile_context>

<pallas_src>
import jax
import jax.numpy as jnp
from jax import lax
from jax.experimental import pallas as pl
from jax.experimental.pallas import tpu as pltpu


# --------------------------------------------------------------------------- #
# Kernels
# --------------------------------------------------------------------------- #
def _dot_nt(a, w):
    # a: (tm, K), w: (tn, K) -> (tm, tn) == a @ w.T, f32 accumulation on MXU.
    # Contracting on the last dims of both operands lowers to a native
    # transposed-RHS MXU matmul (no per-step XLU transpose of the weight tile).
    return lax.dot_general(
        a,
        w,
        dimension_numbers=(((1,), (1,)), ((), ())),
        preferred_element_type=jnp.float32,
    )


def _single_kernel(a_ref, w_ref, o_ref):
    # Whole problem resident in VMEM: one MXU pass, direct store, no scratch.
    o_ref[...] = _dot_nt(a_ref[...], w_ref[...]).astype(o_ref.dtype)


def _fullk_kernel(a_ref, w_ref, o_ref):
    # Full-K per grid step: no accumulator round-trip, no init/finalize phases.
    o_ref[...] = _dot_nt(a_ref[...], w_ref[...]).astype(o_ref.dtype)


def _ksplit_kernel(a_ref, w_ref, o_ref, acc_ref):
    # K tiled on the last ("arbitrary") grid axis; f32 accumulator scratch.
    k = pl.program_id(2)

    @pl.when(k == 0)
    def _():
        acc_ref[...] = jnp.zeros_like(acc_ref)

    acc_ref[...] += _dot_nt(a_ref[...], w_ref[...])

    @pl.when(k == pl.num_programs(2) - 1)
    def _():
        o_ref[...] = acc_ref[...].astype(o_ref.dtype)


# --------------------------------------------------------------------------- #
# Wrapper
# --------------------------------------------------------------------------- #
def _vmem_capacity_bytes():
    try:
        cap = getattr(pltpu.get_tpu_info(), "vmem_capacity_bytes", None)
        if cap:
            return int(cap)
    except Exception:
        pass
    return 64 << 20  # conservative fallback: v7x per-TensorCore VMEM


def linear_adapter_forward(feat, weight):
    """feat: (B, feat_dim), weight: (class_num, feat_dim) -> (B, class_num).

    Equivalent to nn.Linear(feat_dim, class_num, bias=False)(feat).
    """
    B, K = feat.shape
    N, Kw = weight.shape
    assert K == Kw, "feat_dim mismatch between feat and weight"

    dtype = feat.dtype
    itemsize = jnp.dtype(dtype).itemsize
    # Sublane multiple for non-full blocks (f32: 8, bf16: 16, int8/fp8: 32).
    sub = 8 if itemsize >= 4 else (16 if itemsize == 2 else 32)

    vmem_cap = _vmem_capacity_bytes()
    vmem_ceiling = (3 * vmem_cap) // 4          # never request > ~75% of VMEM
    tile_budget = vmem_ceiling - (6 << 20)      # slack for internal scratch

    out_shape = jax.ShapeDtypeStruct((B, N), dtype)

    # ---------- Path 1: single-shot (no grid, whole problem in VMEM) --------
    single_bytes = (B * K + N * K + B * N) * itemsize + B * N * 4  # + f32 MXU result
    if single_bytes <= min(20 << 20, tile_budget):
        return pl.pallas_call(
            _single_kernel,
            out_shape=out_shape,
            in_specs=[
                pl.BlockSpec(memory_space=pltpu.MemorySpace.VMEM),
                pl.BlockSpec(memory_space=pltpu.MemorySpace.VMEM),
            ],
            out_specs=pl.BlockSpec(memory_space=pltpu.MemorySpace.VMEM),
            compiler_params=pltpu.CompilerParams(
                vmem_limit_bytes=int(
                    min(max(single_bytes + (4 << 20), 8 << 20), vmem_ceiling)
                )
            ),
        )(feat, weight)

    def fullk_block_bytes(tm, tn):
        # Double-buffered A, W, and output blocks + f32 MXU result.
        return 2 * (tm + tn) * K * itemsize + 2 * tm * tn * itemsize + tm * tn * 4

    # Prefer 256-multiples for N tiles (v6e/v7x MXU is 256x256); 128 last resort.
    tn_cands = (N,) if N <= 512 else (512, 256, 128)
    tm_cands = (
        (B,) if B <= 512
        else tuple(c for c in (512, 256, 128, 64, 32, 16, 8) if c % sub == 0)
    )

    # ---------- Path 2: full-M, 1-D grid over N -----------------------------
    # Activation block resident (constant index map); weight streamed exactly
    # once from HBM -- optimal traffic for the skinny classifier-head GEMM.
    for tn in tn_cands:
        if fullk_block_bytes(B, tn) <= tile_budget:
            return pl.pallas_call(
                _fullk_kernel,
                out_shape=out_shape,
                grid_spec=pltpu.PrefetchScalarGridSpec(
                    num_scalar_prefetch=0,
                    grid=(pl.cdiv(N, tn),),
                    in_specs=[
                        pl.BlockSpec((B, K), lambda j: (0, 0)),   # A resident
                        pl.BlockSpec((tn, K), lambda j: (j, 0)),  # W streamed once
                    ],
                    out_specs=pl.BlockSpec((B, tn), lambda j: (0, j)),
                ),
                compiler_params=pltpu.CompilerParams(
                    dimension_semantics=("parallel",),
                    vmem_limit_bytes=int(vmem_ceiling),
                ),
            )(feat, weight)

    # ---------- Path 3: 2-D full-K grid, larger operand held resident -------
    chosen = None
    for tn in tn_cands:          # prefer wide N tiles (MXU utilization)
        for tm in tm_cands:
            if fullk_block_bytes(tm, tn) <= tile_budget:
                chosen = (tm, tn)
                break
        if chosen is not None:
            break
    if chosen is not None:
        tm, tn = chosen
        n_m, n_n = pl.cdiv(B, tm), pl.cdiv(N, tn)
        if N >= B:
            # Weight is the larger operand: put it on the OUTER axis so each W
            # tile is DMA'd once and reused across all inner M blocks.
            grid = (n_n, n_m)
            a_spec = pl.BlockSpec((tm, K), lambda j, i: (i, 0))
            w_spec = pl.BlockSpec((tn, K), lambda j, i: (j, 0))
            o_spec = pl.BlockSpec((tm, tn), lambda j, i: (i, j))
        else:
            grid = (n_m, n_n)
            a_spec = pl.BlockSpec((tm, K), lambda i, j: (i, 0))
            w_spec = pl.BlockSpec((tn, K), lambda i, j: (j, 0))
            o_spec = pl.BlockSpec((tm, tn), lambda i, j: (i, j))
        return pl.pallas_call(
            _fullk_kernel,
            out_shape=out_shape,
            grid_spec=pltpu.PrefetchScalarGridSpec(
                num_scalar_prefetch=0,
                grid=grid,
                in_specs=[a_spec, w_spec],
                out_specs=o_spec,
            ),
            compiler_params=pltpu.CompilerParams(
                dimension_semantics=("parallel", "parallel"),
                vmem_limit_bytes=int(vmem_ceiling),
            ),
        )(feat, weight)

    # ---------- Path 4: K-split fallback (very large feat_dim) --------------
    tk = None
    for c in (2048, 1024, 512, 256, 128):
        if K % c == 0:
            tk = c
            break
    if tk is None:
        # Huge K that is not a multiple of 128: zero-pad the contraction dim so
        # ragged K blocks never feed garbage into the accumulation.
        k_pad = (-(-K // 128)) * 128
        feat = jnp.pad(feat, ((0, 0), (0, k_pad - K)))
        weight = jnp.pad(weight, ((0, 0), (0, k_pad - K)))
        K = k_pad
        for c in (2048, 1024, 512, 256, 128):
            if K % c == 0:
                tk = c
                break

    def ksplit_block_bytes(tm, tn):
        return (2 * (tm + tn) * tk * itemsize      # double-buffered A, W blocks
                + 2 * tm * tn * itemsize           # double-buffered output block
                + tm * tn * 4)                     # f32 accumulator scratch

    chosen = None
    for tn in tn_cands:
        for tm in tm_cands:
            if ksplit_block_bytes(tm, tn) <= tile_budget:
                chosen = (tm, tn)
                break
        if chosen is not None:
            break
    if chosen is None:
        chosen = (tm_cands[-1], tn_cands[-1])  # last resort: smallest tiles
    tm, tn = chosen

    return pl.pallas_call(
        _ksplit_kernel,
        out_shape=out_shape,
        grid_spec=pltpu.PrefetchScalarGridSpec(
            num_scalar_prefetch=0,
            grid=(pl.cdiv(N, tn), pl.cdiv(B, tm), K // tk),
            in_specs=[
                pl.BlockSpec((tm, tk), lambda j, i, k: (i, k)),
                pl.BlockSpec((tn, tk), lambda j, i, k: (j, k)),
            ],
            out_specs=pl.BlockSpec((tm, tn), lambda j, i, k: (i, j)),
            scratch_shapes=[pltpu.VMEM((tm, tn), jnp.float32)],
        ),
        compiler_params=pltpu.CompilerParams(
            dimension_semantics=("parallel", "parallel", "arbitrary"),
            vmem_limit_bytes=int(vmem_ceiling),
        ),
    )(feat, weight)


if __name__ == "__main__":
    # Small shapes consistent with the module: feat_dim=256, class_num=128, batch=8.
    feat_dim, class_num, batch = 256, 128, 8

    key = jax.random.PRNGKey(0)
    k_feat, k_w = jax.random.split(key)

    # Deterministic "random init" of the adapter weight (sample_features=None
    # branch): nn.Linear weight shape is (class_num, feat_dim).
    weight = jax.random.normal(k_w, (class_num, feat_dim), dtype=jnp.float32) * 0.02
    feat = jax.random.normal(k_feat, (batch, feat_dim), dtype=jnp.float32)

    out = jax.block_until_ready(linear_adapter_forward(feat, weight))
    ref = feat @ weight.T
    assert out.shape == (batch, class_num)
    assert jnp.allclose(out, ref, atol=1e-4, rtol=1e-4), "mismatch vs reference (small)"

    # Also exercise the tiled full-M path once (weight streamed exactly once).
    B2, K2, N2 = 128, 4096, 2048
    k1, k2 = jax.random.split(jax.random.PRNGKey(1))
    w2 = jax.random.normal(k1, (N2, K2), dtype=jnp.float32) * 0.02
    f2 = jax.random.normal(k2, (B2, K2), dtype=jnp.float32)
    out2 = jax.block_until_ready(linear_adapter_forward(f2, w2))
    ref2 = f2 @ w2.T
    assert out2.shape == (B2, N2)
    assert jnp.allclose(out2, ref2, atol=2e-2, rtol=2e-2), "mismatch vs reference (tiled)"

    print("KERNEL_OK")
</pallas_src>

<mosaic_0001>
module attributes {stable_mosaic.version = 11 : i64} {
  func.func @_single_kernel(%arg0: memref<8x256xf32, #tpu.memory_space<vmem>>, %arg1: memref<128x256xf32, #tpu.memory_space<vmem>>, %arg2: memref<8x128xf32, #tpu.memory_space<vmem>>) attributes {dimension_semantics = [], scalar_prefetch = 0 : i64, scratch_operands = 0 : i64, tpu.core_type = #tpu.core_type<tc>} {
    %c0 = arith.constant 0 : index
    %c0_0 = arith.constant 0 : index
    %0 = vector.load %arg0[%c0, %c0_0] : memref<8x256xf32, #tpu.memory_space<vmem>>, vector<8x256xf32>
    %c0_1 = arith.constant 0 : index
    %c0_2 = arith.constant 0 : index
    %1 = vector.load %arg1[%c0_1, %c0_2] : memref<128x256xf32, #tpu.memory_space<vmem>>, vector<128x256xf32>
    %cst = arith.constant dense<0.000000e+00> : vector<8x128xf32>
    %2 = tpu.matmul %0, %1, %cst {dimension_numbers = #tpu.dot_dimension_numbers<[1], [1], [0], [0], [0, 0, 1, 0], [], []>} : vector<8x256xf32>, vector<128x256xf32>, vector<8x128xf32> -> vector<8x128xf32>
    %c0_3 = arith.constant 0 : index
    %c0_4 = arith.constant 0 : index
    %3 = vector.load %arg2[%c0_3, %c0_4] : memref<8x128xf32, #tpu.memory_space<vmem>>, vector<8x128xf32>
    tpu.vector_store %arg2[%c0_3, %c0_4], %2 {strides = array<i32>} : memref<8x128xf32, #tpu.memory_space<vmem>>, vector<8x128xf32>,
    return
  }
}

</mosaic_0001>

<llo_original>
// kernel: tpu_custom_call.1
$region0: #{tpu_custom_call.1}
  #allocation0 [shape = 'u32[]', space=smem, size = 0x4, offset = 0x4, fixed_abs, tag = 'smem constant byte address 0x4 - core index']
  #allocation1 [shape = 'u32[144,128]{1,0:T(1,128)}', space=vmem, size = 0x12000, scoped, tag = 'internal scratch']
  %s0 = inlined_call_operand.hbm [shape: f32[8,256], index: 0, kind: input, shape index: {}]
  %s1 = inlined_call_operand.hbm [shape: f32[128,256], index: 1, kind: input, shape index: {}]
  %s2 = inlined_call_operand.hbm [shape: f32[8,128], index: 2, kind: output, shape index: {}]
  %s3 = sld [smem:[#allocation0]]
  $region26: #{tpu_custom_call.1} parent=0
    _
  %s5 = ssub.s32 1, %s3
  %s6 = scalar_select 0, %s5, %s3
  $region1: #{tpu_custom_call.1} parent=0
    #allocation2 [shape = 'u8[8192]{0}', space=vmem, size = 0x2000, scoped, tag = 'input window, operand 0, single buffered']
    #allocation3 [shape = 's32[1]{0}', space=sflag, size = 0x4, scoped, tag = 'scoped memory for tpu_custom_call.1']
    #allocation4 [shape = 's32[1]{0}', space=sflag, size = 0x4, scoped, tag = 'scoped memory for tpu_custom_call.1']
    #allocation5 [shape = 'u8[131072]{0}', space=vmem, size = 0x20000, scoped, tag = 'input window, operand 1, single buffered']
    #allocation6 [shape = 's32[1]{0}', space=sflag, size = 0x4, scoped, tag = 'scoped memory for tpu_custom_call.1']
    #allocation7 [shape = 'u8[4096]{0}', space=vmem, size = 0x1000, scoped, tag = 'output window, operand 0, single buffered']
    %7 = vsyncpa [#allocation3], 0
    %8 = vsyncpa [#allocation6], 0
    %9 = vsyncpa [#allocation4], 0
    // Predicated region
    $region2: #{tpu_custom_call.1} parent=1 // pred_check
      _
    $region3: #{tpu_custom_call.1} parent=1 // pred_check_branch
      %11 = sbr.rel (0) target = $region5
    $region4: #{tpu_custom_call.1} parent=1 // pred_region
      %s13 = ssub.s32 256, 256
      %14 = vsyncadd [#allocation3], %s13
      %s16 = sshll.u32 [#allocation2], 4
      %s17 = int_to_ptr.vmem [resolvable:$true] %s16
      %19 = dma.hbm_to_vmem [thread:$0]  %s0, 256, %s17, [#allocation3]
    $region5: #{tpu_custom_call.1} parent=1 // pred_fallthru
      _
    // Predicated region
    $region6: #{tpu_custom_call.1} parent=1 // pred_check
      _
    $region7: #{tpu_custom_call.1} parent=1 // pred_check_branch
      %21 = sbr.rel (0) target = $region9
    $region8: #{tpu_custom_call.1} parent=1 // pred_region
      %s23 = ssub.s32 4096, 4096
      %24 = vsyncadd [#allocation6], %s23
      %s25 = sshll.u32 [#allocation5], 4
      %s26 = int_to_ptr.vmem [resolvable:$true] %s25
      %31 = dma.hbm_to_vmem [thread:$0]  %s1, 4096, %s26, [#allocation6], 256, 256, 16
    $region9: #{tpu_custom_call.1} parent=1 // pred_fallthru
      _
    // Predicated region
    $region10: #{tpu_custom_call.1} parent=1 // pred_check
      _
    $region11: #{tpu_custom_call.1} parent=1 // pred_check_branch
      %33 = sbr.rel (0) target = $region13
    $region12: #{tpu_custom_call.1} parent=1 // pred_region
      %34 = dma.done [#allocation3], 256
    $region13: #{tpu_custom_call.1} parent=1 // pred_fallthru
      _
    // Predicated region
    $region14: #{tpu_custom_call.1} parent=1 // pred_check
      _
    $region15: #{tpu_custom_call.1} parent=1 // pred_check_branch
      %36 = sbr.rel (0) target = $region17
    $region16: #{tpu_custom_call.1} parent=1 // pred_region
      %37 = dma.done [#allocation6], 4096
    $region17: #{tpu_custom_call.1} parent=1 // pred_fallthru
      _
    %v38 = vld [vmem:[#allocation2] sm:$0xff]
    %v39 = vld [vmem:[#allocation2 + $0x8] sm:$0xff]
    %v40 = vld [vmem:[#allocation5] sm:$0xff]
    %v41 = vld [vmem:[#allocation5 + $0x8] sm:$0xff]
    %v42 = vld [vmem:[#allocation5 + $0x10] sm:$0xff]
    %v43 = vld [vmem:[#allocation5 + $0x18] sm:$0xff]
    %v44 = vld [vmem:[#allocation5 + $0x20] sm:$0xff]
    %v45 = vld [vmem:[#allocation5 + $0x28] sm:$0xff]
    %v46 = vld [vmem:[#allocation5 + $0x30] sm:$0xff]
    %v47 = vld [vmem:[#allocation5 + $0x38] sm:$0xff]
    %v48 = vld [vmem:[#allocation5 + $0x40] sm:$0xff]
    %v49 = vld [vmem:[#allocation5 + $0x48] sm:$0xff]
    %v50 = vld [vmem:[#allocation5 + $0x50] sm:$0xff]
    %v51 = vld [vmem:[#allocation5 + $0x58] sm:$0xff]
    %v52 = vld [vmem:[#allocation5 + $0x60] sm:$0xff]
    %v53 = vld [vmem:[#allocation5 + $0x68] sm:$0xff]
    %v54 = vld [vmem:[#allocation5 + $0x70] sm:$0xff]
    %v55 = vld [vmem:[#allocation5 + $0x78] sm:$0xff]
    %v56 = vld [vmem:[#allocation5 + $0x80] sm:$0xff]
    %v57 = vld [vmem:[#allocation5 + $0x88] sm:$0xff]
    %v58 = vld [vmem:[#allocation5 + $0x90] sm:$0xff]
    %v59 = vld [vmem:[#allocation5 + $0x98] sm:$0xff]
    %v60 = vld [vmem:[#allocation5 + $0xa0] sm:$0xff]
    %v61 = vld [vmem:[#allocation5 + $0xa8] sm:$0xff]
    %v62 = vld [vmem:[#allocation5 + $0xb0] sm:$0xff]
    %v63 = vld [vmem:[#allocation5 + $0xb8] sm:$0xff]
    %v64 = vld [vmem:[#allocation5 + $0xc0] sm:$0xff]
    %v65 = vld [vmem:[#allocation5 + $0xc8] sm:$0xff]
    %v66 = vld [vmem:[#allocation5 + $0xd0] sm:$0xff]
    %v67 = vld [vmem:[#allocation5 + $0xd8] sm:$0xff]
    %v68 = vld [vmem:[#allocation5 + $0xe0] sm:$0xff]
    %v69 = vld [vmem:[#allocation5 + $0xe8] sm:$0xff]
    %v70 = vld [vmem:[#allocation5 + $0xf0] sm:$0xff]
    %v71 = vld [vmem:[#allocation5 + $0xf8] sm:$0xff]
    %72 = vmatprep.subr.mxu0 %v41
    %73 = vmatpush1.xpose.msra.mxu0 %v40
    %74 = vmatprep.subr.mxu0 %v43
    %75 = vmatpush1.xpose.msra.mxu0 %v42
    %76 = vmatprep.subr.mxu0 %v45
    %77 = vmatpush1.xpose.msra.mxu0 %v44
    %78 = vmatprep.subr.mxu0 %v47
    %79 = vmatpush1.xpose.msra.mxu0 %v46
    %80 = vmatprep.subr.mxu0 %v49
    %81 = vmatpush1.xpose.msra.mxu0 %v48
    %82 = vmatprep.subr.mxu0 %v51
    %83 = vmatpush1.xpose.msra.mxu0 %v50
    %84 = vmatprep.subr.mxu0 %v53
    %85 = vmatpush1.xpose.msra.mxu0 %v52
    %86 = vmatprep.subr.mxu0 %v55
    %87 = vmatpush1.xpose.msra.mxu0 %v54
    %88 = vmatprep.subr.mxu0 %v57
    %89 = vmatpush1.xpose.msra.mxu0 %v56
    %90 = vmatprep.subr.mxu0 %v59
    %91 = vmatpush1.xpose.msra.mxu0 %v58
    %92 = vmatprep.subr.mxu0 %v61
    %93 = vmatpush1.xpose.msra.mxu0 %v60
    %94 = vmatprep.subr.mxu0 %v63
    %95 = vmatpush1.xpose.msra.mxu0 %v62
    %96 = vmatprep.subr.mxu0 %v65
    %97 = vmatpush1.xpose.msra.mxu0 %v64
    %98 = vmatprep.subr.mxu0 %v67
    %99 = vmatpush1.xpose.msra.mxu0 %v66
    %100 = vmatprep.subr.mxu0 %v69
    %101 = vmatpush1.xpose.msra.mxu0 %v68
    %102 = vmatprep.subr.mxu0 %v71
    %103 = vmatpush1.xpose.msra.mxu0 %v70
    %104 = vmatprep.subr.mxu0 0.0
    %105 = vmatpush1.xpose.msra.mxu0 0.0
    %106 = vmatprep.subr.mxu0 0.0
    %107 = vmatpush1.xpose.msra.mxu0 0.0
    %108 = vmatprep.subr.mxu0 0.0
    %109 = vmatpush1.xpose.msra.mxu0 0.0
    %110 = vmatprep.subr.mxu0 0.0
    %111 = vmatpush1.xpose.msra.mxu0 0.0
    %112 = vmatprep.subr.mxu0 0.0
    %113 = vmatpush1.xpose.msra.mxu0 0.0
    %114 = vmatprep.subr.mxu0 0.0
    %115 = vmatpush1.xpose.msra.mxu0 0.0
    %116 = vmatprep.subr.mxu0 0.0
    %117 = vmatpush1.xpose.msra.mxu0 0.0
    %118 = vmatprep.subr.mxu0 0.0
    %119 = vmatpush1.xpose.msra.mxu0 0.0
    %120 = vmatprep.subr.mxu0 0.0
    %121 = vmatpush1.xpose.msra.mxu0 0.0
    %122 = vmatprep.subr.mxu0 0.0
    %123 = vmatpush1.xpose.msra.mxu0 0.0
    %124 = vmatprep.subr.mxu0 0.0
    %125 = vmatpush1.xpose.msra.mxu0 0.0
    %126 = vmatprep.subr.mxu0 0.0
    %127 = vmatpush1.xpose.msra.mxu0 0.0
    %128 = vmatprep.subr.mxu0 0.0
    %129 = vmatpush1.xpose.msra.mxu0 0.0
    %130 = vmatprep.subr.mxu0 0.0
    %131 = vmatpush1.xpose.msra.mxu0 0.0
    %132 = vmatprep.subr.mxu0 0.0
    %133 = vmatpush1.xpose.msra.mxu0 0.0
    %134 = vmatprep.subr.mxu0 0.0
    %135 = vmatpush1.xpose.msra.mxu0 0.0
    %136 = vmatprep.mubr.f32.mxu0 %v39
    %137 = vmatmul.mubr.f32.gmra.mrb[0].mxu0 %v38
    %v138 = vpop.f32.mrb[0].mxu0
    %v139 = vadd.f32 0.0, %v138
    %v140 = vpop.f32.mrb[0].mxu0
    %141 = vdwg.mxu0
    %142 = vst [vmem:[#allocation7] sm:$0xff] %v139
    // Predicated region
    $region18: #{tpu_custom_call.1} parent=1 // pred_check
      _
    $region19: #{tpu_custom_call.1} parent=1 // pred_check_branch
      %144 = sbr.rel (0) target = $region21
    $region20: #{tpu_custom_call.1} parent=1 // pred_region
      %s146 = ssub.s32 128, 128
      %147 = vsyncadd [#allocation4], %s146
      %s149 = sshll.u32 [#allocation7], 4
      %s150 = int_to_ptr.vmem [resolvable:$true] %s149
      %152 = dma.vmem_to_hbm [thread:$0]  %s150, 128, %s2, [#allocation4]
    $region21: #{tpu_custom_call.1} parent=1 // pred_fallthru
      _
    // Predicated region
    $region22: #{tpu_custom_call.1} parent=1 // pred_check
      _
    $region23: #{tpu_custom_call.1} parent=1 // pred_check_branch
      %154 = sbr.rel (0) target = $region25
    $region24: #{tpu_custom_call.1} parent=1 // pred_region
      %155 = dma.done [#allocation4], 128
    $region25: #{tpu_custom_call.1} parent=1 // pred_fallthru
      _
    %156 = vsyncpa [#allocation3], 1
    %157 = vsyncpa [#allocation6], 1
    %158 = vsyncpa [#allocation4], 1

</llo_original>
